<compile_context>
chip_gen: v7x
topology: tpu7x:2x2x1
jax: 0.10.0
libtpu: 0.0.40
codegen_flags: <defaults>
</compile_context>

<pallas_src>
import functools

import jax
import jax.numpy as jnp
import numpy as np
from jax.experimental import pallas as pl
from jax.experimental.pallas import tpu as pltpu

_LANES = 128
_TILE_B_MAX_DEFAULT = 65536  # lanes per grid step (multiple of 1024)


def _round_up(n, m):
    return ((n + m - 1) // m) * m


def _choose_tile_t(T, tile_t_max):
    """Pick the sublane-tile size (tile_b = tile_t * 128)."""
    if T > tile_t_max:
        return tile_t_max
    if T >= 16:
        # Keep the grid >= 2 steps so the "parallel" batch axis feeds both
        # TensorCores on v7x (no-op on v5e/v6e) while still amortizing the
        # ~0.35us per-grid-step overhead.
        return min(tile_t_max, _round_up(-(-T // 2), 8))
    # Tiny batch: single block; block dim == full array dim is always legal.
    return T


def _dense_layer(w_ref, b_ref, h, n_out, n_in, relu):
    """out[j] = act(sum_i w[j,i] * h[i] + b[j]).

    h: list of n_in (tile_t, 128) fully-dense slabs.
    w_ref: (n_out, n_in) SMEM ref, b_ref: (n_out,) SMEM ref.
    Scalar weights are splatted via the scalar path; every term is a single
    full-vreg VPU op.  Returns a list of n_out (tile_t, 128) slabs.
    """
    outs = []
    for j in range(n_out):
        acc = h[0] * w_ref[j, 0]
        for i in range(1, n_in):
            acc = acc + h[i] * w_ref[j, i]
        acc = acc + b_ref[j]
        if relu:
            acc = jnp.maximum(acc, 0.0)
        outs.append(acc)
    return outs


def _mlp_kernel(x_ref,
                w1_ref, b1_ref,
                w2_ref, b2_ref,
                w3_ref, b3_ref,
                w4_ref, b4_ref,
                out_ref):
    # x_ref: (7, tile_t, 128) VMEM -- batch packed over sublanes AND lanes.
    h = [x_ref[i] for i in range(7)]            # 7 dense (tile_t, 128) slabs
    h = _dense_layer(w1_ref, b1_ref, h, 5, 7, relu=True)
    h = _dense_layer(w2_ref, b2_ref, h, 3, 5, relu=True)
    h = _dense_layer(w3_ref, b3_ref, h, 2, 3, relu=True)
    (z,) = _dense_layer(w4_ref, b4_ref, h, 1, 2, relu=False)
    # Numerically-stable sigmoid: single EUP tanh instead of exp+add+divide.
    out_ref[...] = (0.5 * jnp.tanh(0.5 * z) + 0.5).astype(out_ref.dtype)


def _mlp_packed_call(x_packed, params, tile_t):
    """x_packed: (7, T, 128) f32 -> (T, 128) f32."""
    _, T, _ = x_packed.shape
    grid = (pl.cdiv(T, tile_t),)
    smem = pl.BlockSpec(memory_space=pltpu.MemorySpace.SMEM)
    return pl.pallas_call(
        _mlp_kernel,
        out_shape=jax.ShapeDtypeStruct((T, _LANES), jnp.float32),
        grid=grid,
        in_specs=[
            # Lane+sublane dense x tile; ragged last block handled by Pallas.
            pl.BlockSpec((7, tile_t, _LANES), lambda i: (0, i, 0)),
            # Weights/biases: whole arrays resident in SMEM, read as scalars.
            smem, smem, smem, smem, smem, smem, smem, smem,
        ],
        out_specs=pl.BlockSpec((tile_t, _LANES), lambda i: (i, 0)),
        compiler_params=pltpu.CompilerParams(
            dimension_semantics=("parallel",),
            # Working set ~7 MiB at tile_b=65536; 32 MiB is safe on all of
            # v5e (128 MiB phys) / v6e (128 MiB) / v7x (64 MiB phys).
            vmem_limit_bytes=32 * 1024 * 1024,
        ),
    )(x_packed,
      params["w1"], params["b1"],
      params["w2"], params["b2"],
      params["w3"], params["b3"],
      params["w4"], params["b4"])


@functools.partial(jax.jit, static_argnames=("tile_b_max",))
def mlp_forward_packed(x_fm, params, tile_b_max=_TILE_B_MAX_DEFAULT):
    """Zero-copy fast path: x_fm is feature-major (7, B) float32 -> (B, 1).

    When the producer emits activations feature-major with B % 128 == 0, no
    HBM copy happens before the kernel (the (7,B)->(7,T,128) reshape is a
    free bitcast).
    """
    n_in, B = x_fm.shape
    assert n_in == 7
    tile_t_max = max(8, _round_up(tile_b_max, 1024) // _LANES)
    T = -(-B // _LANES)
    b_pad = T * _LANES
    if b_pad != B:
        x_fm = jnp.pad(x_fm, ((0, 0), (0, b_pad - B)))
    x_packed = x_fm.reshape(7, T, _LANES)
    tile_t = _choose_tile_t(T, tile_t_max)
    out = _mlp_packed_call(x_packed, params, tile_t)       # (T, 128)
    return out.reshape(b_pad)[:B].reshape(B, 1)


@functools.partial(jax.jit, static_argnames=("tile_b_max",))
def mlp_forward(x, params, tile_b_max=_TILE_B_MAX_DEFAULT):
    """PyTorch-layout entry point: x is (B, 7) float32 -> (B, 1) float32."""
    B, n_in = x.shape
    assert n_in == 7
    # TODO(synk): if the upstream producer can emit feature-major (7, B)
    # activations, drop this transpose (the only pre-kernel HBM copy) and
    # call mlp_forward_packed directly.
    return mlp_forward_packed(x.T, params, tile_b_max=tile_b_max)


def init_params(key):
    """Deterministic init mimicking torch.nn.Linear (uniform +-1/sqrt(fan_in)).
    Weights in PyTorch layout (out_features, in_features); biases (out,)."""
    dims = [(5, 7), (3, 5), (2, 3), (1, 2)]          # (fan_out, fan_in)
    params = {}
    for i, (fan_out, fan_in) in enumerate(dims, start=1):
        key, kw, kb = jax.random.split(key, 3)
        bound = 1.0 / float(np.sqrt(fan_in))
        params[f"w{i}"] = jax.random.uniform(
            kw, (fan_out, fan_in), jnp.float32, -bound, bound)
        params[f"b{i}"] = jax.random.uniform(
            kb, (fan_out,), jnp.float32, -bound, bound)
    return params


def mlp_reference(x, params):
    z = jnp.maximum(x @ params["w1"].T + params["b1"], 0.0)
    z = jnp.maximum(z @ params["w2"].T + params["b2"], 0.0)
    z = jnp.maximum(z @ params["w3"].T + params["b3"], 0.0)
    return jax.nn.sigmoid(z @ params["w4"].T + params["b4"])


if __name__ == "__main__":
    key = jax.random.PRNGKey(0)
    key, k1, k2 = jax.random.split(key, 3)
    params = init_params(key)

    # Small case (matches the PyTorch module's typical usage) and a larger
    # case exercising a multi-step grid + ragged last block (T=24, tile_t=16).
    for kx, B in ((k1, 8), (k2, 3000)):
        x = jax.random.normal(kx, (B, 7), jnp.float32)
        y = mlp_forward(x, params)
        jax.block_until_ready(y)
        y_ref = mlp_reference(x, params)
        assert y.shape == (B, 1)
        assert jnp.allclose(y, y_ref, atol=1e-5, rtol=1e-5)

    # Zero-copy feature-major entry point.
    x = jax.random.normal(k1, (8, 7), jnp.float32)
    y_fm = mlp_forward_packed(jnp.transpose(x), params)
    jax.block_until_ready(y_fm)
    assert jnp.allclose(y_fm, mlp_reference(x, params), atol=1e-5, rtol=1e-5)

    print("KERNEL_OK")
</pallas_src>

<mosaic_0001>
module attributes {stable_mosaic.version = 11 : i64} {
  func.func @_mlp_kernel(%arg0: i32, %arg1: memref<7x1x128xf32, #tpu.memory_space<vmem>>, %arg2: memref<5x7xf32, #tpu.memory_space<smem>>, %arg3: memref<5xf32, #tpu.memory_space<smem>>, %arg4: memref<3x5xf32, #tpu.memory_space<smem>>, %arg5: memref<3xf32, #tpu.memory_space<smem>>, %arg6: memref<2x3xf32, #tpu.memory_space<smem>>, %arg7: memref<2xf32, #tpu.memory_space<smem>>, %arg8: memref<1x2xf32, #tpu.memory_space<smem>>, %arg9: memref<1xf32, #tpu.memory_space<smem>>, %arg10: memref<1x128xf32, #tpu.memory_space<vmem>>) attributes {dimension_semantics = [#tpu.dimension_semantics<parallel>], iteration_bounds = array<i64: 1>, scalar_prefetch = 0 : i64, scratch_operands = 0 : i64, tpu.core_type = #tpu.core_type<tc>, window_params = [{transform_indices = @transform_0, window_bounds = array<i64: 7, 1, 128>}, {transform_indices = @transform_1, window_bounds = array<i64: 5, 7>}, {transform_indices = @transform_2, window_bounds = array<i64: 5>}, {transform_indices = @transform_3, window_bounds = array<i64: 3, 5>}, {transform_indices = @transform_4, window_bounds = array<i64: 3>}, {transform_indices = @transform_5, window_bounds = array<i64: 2, 3>}, {transform_indices = @transform_6, window_bounds = array<i64: 2>}, {transform_indices = @transform_7, window_bounds = array<i64: 1, 2>}, {transform_indices = @transform_8, window_bounds = array<i64: 1>}, {transform_indices = @transform_9, window_bounds = array<i64: 1, 128>}]} {
    %c0 = arith.constant 0 : index
    %c0_0 = arith.constant 0 : index
    %c0_1 = arith.constant 0 : index
    %0 = vector.load %arg1[%c0, %c0_0, %c0_1] : memref<7x1x128xf32, #tpu.memory_space<vmem>>, vector<1x1x128xf32>
    %1 = vector.shape_cast %0 : vector<1x1x128xf32> to vector<1x128xf32>
    %c1 = arith.constant 1 : index
    %c0_2 = arith.constant 0 : index
    %c0_3 = arith.constant 0 : index
    %2 = vector.load %arg1[%c1, %c0_2, %c0_3] : memref<7x1x128xf32, #tpu.memory_space<vmem>>, vector<1x1x128xf32>
    %3 = vector.shape_cast %2 : vector<1x1x128xf32> to vector<1x128xf32>
    %c2 = arith.constant 2 : index
    %c0_4 = arith.constant 0 : index
    %c0_5 = arith.constant 0 : index
    %4 = vector.load %arg1[%c2, %c0_4, %c0_5] : memref<7x1x128xf32, #tpu.memory_space<vmem>>, vector<1x1x128xf32>
    %5 = vector.shape_cast %4 : vector<1x1x128xf32> to vector<1x128xf32>
    %c3 = arith.constant 3 : index
    %c0_6 = arith.constant 0 : index
    %c0_7 = arith.constant 0 : index
    %6 = vector.load %arg1[%c3, %c0_6, %c0_7] : memref<7x1x128xf32, #tpu.memory_space<vmem>>, vector<1x1x128xf32>
    %7 = vector.shape_cast %6 : vector<1x1x128xf32> to vector<1x128xf32>
    %c4 = arith.constant 4 : index
    %c0_8 = arith.constant 0 : index
    %c0_9 = arith.constant 0 : index
    %8 = vector.load %arg1[%c4, %c0_8, %c0_9] : memref<7x1x128xf32, #tpu.memory_space<vmem>>, vector<1x1x128xf32>
    %9 = vector.shape_cast %8 : vector<1x1x128xf32> to vector<1x128xf32>
    %c5 = arith.constant 5 : index
    %c0_10 = arith.constant 0 : index
    %c0_11 = arith.constant 0 : index
    %10 = vector.load %arg1[%c5, %c0_10, %c0_11] : memref<7x1x128xf32, #tpu.memory_space<vmem>>, vector<1x1x128xf32>
    %11 = vector.shape_cast %10 : vector<1x1x128xf32> to vector<1x128xf32>
    %c6 = arith.constant 6 : index
    %c0_12 = arith.constant 0 : index
    %c0_13 = arith.constant 0 : index
    %12 = vector.load %arg1[%c6, %c0_12, %c0_13] : memref<7x1x128xf32, #tpu.memory_space<vmem>>, vector<1x1x128xf32>
    %13 = vector.shape_cast %12 : vector<1x1x128xf32> to vector<1x128xf32>
    %c0_14 = arith.constant 0 : index
    %c0_15 = arith.constant 0 : index
    %14 = memref.load %arg2[%c0_14, %c0_15] : memref<5x7xf32, #tpu.memory_space<smem>>
    %15 = vector.broadcast %14 : f32 to vector<1x128xf32>
    %16 = arith.mulf %1, %15 : vector<1x128xf32>
    %c0_16 = arith.constant 0 : index
    %c1_17 = arith.constant 1 : index
    %17 = memref.load %arg2[%c0_16, %c1_17] : memref<5x7xf32, #tpu.memory_space<smem>>
    %18 = vector.broadcast %17 : f32 to vector<1x128xf32>
    %19 = arith.mulf %3, %18 : vector<1x128xf32>
    %20 = arith.addf %16, %19 : vector<1x128xf32>
    %c0_18 = arith.constant 0 : index
    %c2_19 = arith.constant 2 : index
    %21 = memref.load %arg2[%c0_18, %c2_19] : memref<5x7xf32, #tpu.memory_space<smem>>
    %22 = vector.broadcast %21 : f32 to vector<1x128xf32>
    %23 = arith.mulf %5, %22 : vector<1x128xf32>
    %24 = arith.addf %20, %23 : vector<1x128xf32>
    %c0_20 = arith.constant 0 : index
    %c3_21 = arith.constant 3 : index
    %25 = memref.load %arg2[%c0_20, %c3_21] : memref<5x7xf32, #tpu.memory_space<smem>>
    %26 = vector.broadcast %25 : f32 to vector<1x128xf32>
    %27 = arith.mulf %7, %26 : vector<1x128xf32>
    %28 = arith.addf %24, %27 : vector<1x128xf32>
    %c0_22 = arith.constant 0 : index
    %c4_23 = arith.constant 4 : index
    %29 = memref.load %arg2[%c0_22, %c4_23] : memref<5x7xf32, #tpu.memory_space<smem>>
    %30 = vector.broadcast %29 : f32 to vector<1x128xf32>
    %31 = arith.mulf %9, %30 : vector<1x128xf32>
    %32 = arith.addf %28, %31 : vector<1x128xf32>
    %c0_24 = arith.constant 0 : index
    %c5_25 = arith.constant 5 : index
    %33 = memref.load %arg2[%c0_24, %c5_25] : memref<5x7xf32, #tpu.memory_space<smem>>
    %34 = vector.broadcast %33 : f32 to vector<1x128xf32>
    %35 = arith.mulf %11, %34 : vector<1x128xf32>
    %36 = arith.addf %32, %35 : vector<1x128xf32>
    %c0_26 = arith.constant 0 : index
    %c6_27 = arith.constant 6 : index
    %37 = memref.load %arg2[%c0_26, %c6_27] : memref<5x7xf32, #tpu.memory_space<smem>>
    %38 = vector.broadcast %37 : f32 to vector<1x128xf32>
    %39 = arith.mulf %13, %38 : vector<1x128xf32>
    %40 = arith.addf %36, %39 : vector<1x128xf32>
    %c0_28 = arith.constant 0 : index
    %41 = memref.load %arg3[%c0_28] : memref<5xf32, #tpu.memory_space<smem>>
    %42 = vector.broadcast %41 : f32 to vector<1x128xf32>
    %43 = arith.addf %40, %42 : vector<1x128xf32>
    %cst = arith.constant 0.000000e+00 : f32
    %44 = vector.broadcast %cst : f32 to vector<1x128xf32>
    %45 = arith.maximumf %43, %44 : vector<1x128xf32>
    %c1_29 = arith.constant 1 : index
    %c0_30 = arith.constant 0 : index
    %46 = memref.load %arg2[%c1_29, %c0_30] : memref<5x7xf32, #tpu.memory_space<smem>>
    %47 = vector.broadcast %46 : f32 to vector<1x128xf32>
    %48 = arith.mulf %1, %47 : vector<1x128xf32>
    %c1_31 = arith.constant 1 : index
    %c1_32 = arith.constant 1 : index
    %49 = memref.load %arg2[%c1_31, %c1_32] : memref<5x7xf32, #tpu.memory_space<smem>>
    %50 = vector.broadcast %49 : f32 to vector<1x128xf32>
    %51 = arith.mulf %3, %50 : vector<1x128xf32>
    %52 = arith.addf %48, %51 : vector<1x128xf32>
    %c1_33 = arith.constant 1 : index
    %c2_34 = arith.constant 2 : index
    %53 = memref.load %arg2[%c1_33, %c2_34] : memref<5x7xf32, #tpu.memory_space<smem>>
    %54 = vector.broadcast %53 : f32 to vector<1x128xf32>
    %55 = arith.mulf %5, %54 : vector<1x128xf32>
    %56 = arith.addf %52, %55 : vector<1x128xf32>
    %c1_35 = arith.constant 1 : index
    %c3_36 = arith.constant 3 : index
    %57 = memref.load %arg2[%c1_35, %c3_36] : memref<5x7xf32, #tpu.memory_space<smem>>
    %58 = vector.broadcast %57 : f32 to vector<1x128xf32>
    %59 = arith.mulf %7, %58 : vector<1x128xf32>
    %60 = arith.addf %56, %59 : vector<1x128xf32>
    %c1_37 = arith.constant 1 : index
    %c4_38 = arith.constant 4 : index
    %61 = memref.load %arg2[%c1_37, %c4_38] : memref<5x7xf32, #tpu.memory_space<smem>>
    %62 = vector.broadcast %61 : f32 to vector<1x128xf32>
    %63 = arith.mulf %9, %62 : vector<1x128xf32>
    %64 = arith.addf %60, %63 : vector<1x128xf32>
    %c1_39 = arith.constant 1 : index
    %c5_40 = arith.constant 5 : index
    %65 = memref.load %arg2[%c1_39, %c5_40] : memref<5x7xf32, #tpu.memory_space<smem>>
    %66 = vector.broadcast %65 : f32 to vector<1x128xf32>
    %67 = arith.mulf %11, %66 : vector<1x128xf32>
    %68 = arith.addf %64, %67 : vector<1x128xf32>
    %c1_41 = arith.constant 1 : index
    %c6_42 = arith.constant 6 : index
    %69 = memref.load %arg2[%c1_41, %c6_42] : memref<5x7xf32, #tpu.memory_space<smem>>
    %70 = vector.broadcast %69 : f32 to vector<1x128xf32>
    %71 = arith.mulf %13, %70 : vector<1x128xf32>
    %72 = arith.addf %68, %71 : vector<1x128xf32>
    %c1_43 = arith.constant 1 : index
    %73 = memref.load %arg3[%c1_43] : memref<5xf32, #tpu.memory_space<smem>>
    %74 = vector.broadcast %73 : f32 to vector<1x128xf32>
    %75 = arith.addf %72, %74 : vector<1x128xf32>
    %cst_44 = arith.constant 0.000000e+00 : f32
    %76 = vector.broadcast %cst_44 : f32 to vector<1x128xf32>
    %77 = arith.maximumf %75, %76 : vector<1x128xf32>
    %c2_45 = arith.constant 2 : index
    %c0_46 = arith.constant 0 : index
    %78 = memref.load %arg2[%c2_45, %c0_46] : memref<5x7xf32, #tpu.memory_space<smem>>
    %79 = vector.broadcast %78 : f32 to vector<1x128xf32>
    %80 = arith.mulf %1, %79 : vector<1x128xf32>
    %c2_47 = arith.constant 2 : index
    %c1_48 = arith.constant 1 : index
    %81 = memref.load %arg2[%c2_47, %c1_48] : memref<5x7xf32, #tpu.memory_space<smem>>
    %82 = vector.broadcast %81 : f32 to vector<1x128xf32>
    %83 = arith.mulf %3, %82 : vector<1x128xf32>
    %84 = arith.addf %80, %83 : vector<1x128xf32>
    %c2_49 = arith.constant 2 : index
    %c2_50 = arith.constant 2 : index
    %85 = memref.load %arg2[%c2_49, %c2_50] : memref<5x7xf32, #tpu.memory_space<smem>>
    %86 = vector.broadcast %85 : f32 to vector<1x128xf32>
    %87 = arith.mulf %5, %86 : vector<1x128xf32>
    %88 = arith.addf %84, %87 : vector<1x128xf32>
    %c2_51 = arith.constant 2 : index
    %c3_52 = arith.constant 3 : index
    %89 = memref.load %arg2[%c2_51, %c3_52] : memref<5x7xf32, #tpu.memory_space<smem>>
    %90 = vector.broadcast %89 : f32 to vector<1x128xf32>
    %91 = arith.mulf %7, %90 : vector<1x128xf32>
    %92 = arith.addf %88, %91 : vector<1x128xf32>
    %c2_53 = arith.constant 2 : index
    %c4_54 = arith.constant 4 : index
    %93 = memref.load %arg2[%c2_53, %c4_54] : memref<5x7xf32, #tpu.memory_space<smem>>
    %94 = vector.broadcast %93 : f32 to vector<1x128xf32>
    %95 = arith.mulf %9, %94 : vector<1x128xf32>
    %96 = arith.addf %92, %95 : vector<1x128xf32>
    %c2_55 = arith.constant 2 : index
    %c5_56 = arith.constant 5 : index
    %97 = memref.load %arg2[%c2_55, %c5_56] : memref<5x7xf32, #tpu.memory_space<smem>>
    %98 = vector.broadcast %97 : f32 to vector<1x128xf32>
    %99 = arith.mulf %11, %98 : vector<1x128xf32>
    %100 = arith.addf %96, %99 : vector<1x128xf32>
    %c2_57 = arith.constant 2 : index
    %c6_58 = arith.constant 6 : index
    %101 = memref.load %arg2[%c2_57, %c6_58] : memref<5x7xf32, #tpu.memory_space<smem>>
    %102 = vector.broadcast %101 : f32 to vector<1x128xf32>
    %103 = arith.mulf %13, %102 : vector<1x128xf32>
    %104 = arith.addf %100, %103 : vector<1x128xf32>
    %c2_59 = arith.constant 2 : index
    %105 = memref.load %arg3[%c2_59] : memref<5xf32, #tpu.memory_space<smem>>
    %106 = vector.broadcast %105 : f32 to vector<1x128xf32>
    %107 = arith.addf %104, %106 : vector<1x128xf32>
    %cst_60 = arith.constant 0.000000e+00 : f32
    %108 = vector.broadcast %cst_60 : f32 to vector<1x128xf32>
    %109 = arith.maximumf %107, %108 : vector<1x128xf32>
    %c3_61 = arith.constant 3 : index
    %c0_62 = arith.constant 0 : index
    %110 = memref.load %arg2[%c3_61, %c0_62] : memref<5x7xf32, #tpu.memory_space<smem>>
    %111 = vector.broadcast %110 : f32 to vector<1x128xf32>
    %112 = arith.mulf %1, %111 : vector<1x128xf32>
    %c3_63 = arith.constant 3 : index
    %c1_64 = arith.constant 1 : index
    %113 = memref.load %arg2[%c3_63, %c1_64] : memref<5x7xf32, #tpu.memory_space<smem>>
    %114 = vector.broadcast %113 : f32 to vector<1x128xf32>
    %115 = arith.mulf %3, %114 : vector<1x128xf32>
    %116 = arith.addf %112, %115 : vector<1x128xf32>
    %c3_65 = arith.constant 3 : index
    %c2_66 = arith.constant 2 : index
    %117 = memref.load %arg2[%c3_65, %c2_66] : memref<5x7xf32, #tpu.memory_space<smem>>
    %118 = vector.broadcast %117 : f32 to vector<1x128xf32>
    %119 = arith.mulf %5, %118 : vector<1x128xf32>
    %120 = arith.addf %116, %119 : vector<1x128xf32>
    %c3_67 = arith.constant 3 : index
    %c3_68 = arith.constant 3 : index
    %121 = memref.load %arg2[%c3_67, %c3_68] : memref<5x7xf32, #tpu.memory_space<smem>>
    %122 = vector.broadcast %121 : f32 to vector<1x128xf32>
    %123 = arith.mulf %7, %122 : vector<1x128xf32>
    %124 = arith.addf %120, %123 : vector<1x128xf32>
    %c3_69 = arith.constant 3 : index
    %c4_70 = arith.constant 4 : index
    %125 = memref.load %arg2[%c3_69, %c4_70] : memref<5x7xf32, #tpu.memory_space<smem>>
    %126 = vector.broadcast %125 : f32 to vector<1x128xf32>
    %127 = arith.mulf %9, %126 : vector<1x128xf32>
    %128 = arith.addf %124, %127 : vector<1x128xf32>
    %c3_71 = arith.constant 3 : index
    %c5_72 = arith.constant 5 : index
    %129 = memref.load %arg2[%c3_71, %c5_72] : memref<5x7xf32, #tpu.memory_space<smem>>
    %130 = vector.broadcast %129 : f32 to vector<1x128xf32>
    %131 = arith.mulf %11, %130 : vector<1x128xf32>
    %132 = arith.addf %128, %131 : vector<1x128xf32>
    %c3_73 = arith.constant 3 : index
    %c6_74 = arith.constant 6 : index
    %133 = memref.load %arg2[%c3_73, %c6_74] : memref<5x7xf32, #tpu.memory_space<smem>>
    %134 = vector.broadcast %133 : f32 to vector<1x128xf32>
    %135 = arith.mulf %13, %134 : vector<1x128xf32>
    %136 = arith.addf %132, %135 : vector<1x128xf32>
    %c3_75 = arith.constant 3 : index
    %137 = memref.load %arg3[%c3_75] : memref<5xf32, #tpu.memory_space<smem>>
    %138 = vector.broadcast %137 : f32 to vector<1x128xf32>
    %139 = arith.addf %136, %138 : vector<1x128xf32>
    %cst_76 = arith.constant 0.000000e+00 : f32
    %140 = vector.broadcast %cst_76 : f32 to vector<1x128xf32>
    %141 = arith.maximumf %139, %140 : vector<1x128xf32>
    %c4_77 = arith.constant 4 : index
    %c0_78 = arith.constant 0 : index
    %142 = memref.load %arg2[%c4_77, %c0_78] : memref<5x7xf32, #tpu.memory_space<smem>>
    %143 = vector.broadcast %142 : f32 to vector<1x128xf32>
    %144 = arith.mulf %1, %143 : vector<1x128xf32>
    %c4_79 = arith.constant 4 : index
    %c1_80 = arith.constant 1 : index
    %145 = memref.load %arg2[%c4_79, %c1_80] : memref<5x7xf32, #tpu.memory_space<smem>>
    %146 = vector.broadcast %145 : f32 to vector<1x128xf32>
    %147 = arith.mulf %3, %146 : vector<1x128xf32>
    %148 = arith.addf %144, %147 : vector<1x128xf32>
    %c4_81 = arith.constant 4 : index
    %c2_82 = arith.constant 2 : index
    %149 = memref.load %arg2[%c4_81, %c2_82] : memref<5x7xf32, #tpu.memory_space<smem>>
    %150 = vector.broadcast %149 : f32 to vector<1x128xf32>
    %151 = arith.mulf %5, %150 : vector<1x128xf32>
    %152 = arith.addf %148, %151 : vector<1x128xf32>
    %c4_83 = arith.constant 4 : index
    %c3_84 = arith.constant 3 : index
    %153 = memref.load %arg2[%c4_83, %c3_84] : memref<5x7xf32, #tpu.memory_space<smem>>
    %154 = vector.broadcast %153 : f32 to vector<1x128xf32>
    %155 = arith.mulf %7, %154 : vector<1x128xf32>
    %156 = arith.addf %152, %155 : vector<1x128xf32>
    %c4_85 = arith.constant 4 : index
    %c4_86 = arith.constant 4 : index
    %157 = memref.load %arg2[%c4_85, %c4_86] : memref<5x7xf32, #tpu.memory_space<smem>>
    %158 = vector.broadcast %157 : f32 to vector<1x128xf32>
    %159 = arith.mulf %9, %158 : vector<1x128xf32>
    %160 = arith.addf %156, %159 : vector<1x128xf32>
    %c4_87 = arith.constant 4 : index
    %c5_88 = arith.constant 5 : index
    %161 = memref.load %arg2[%c4_87, %c5_88] : memref<5x7xf32, #tpu.memory_space<smem>>
    %162 = vector.broadcast %161 : f32 to vector<1x128xf32>
    %163 = arith.mulf %11, %162 : vector<1x128xf32>
    %164 = arith.addf %160, %163 : vector<1x128xf32>
    %c4_89 = arith.constant 4 : index
    %c6_90 = arith.constant 6 : index
    %165 = memref.load %arg2[%c4_89, %c6_90] : memref<5x7xf32, #tpu.memory_space<smem>>
    %166 = vector.broadcast %165 : f32 to vector<1x128xf32>
    %167 = arith.mulf %13, %166 : vector<1x128xf32>
    %168 = arith.addf %164, %167 : vector<1x128xf32>
    %c4_91 = arith.constant 4 : index
    %169 = memref.load %arg3[%c4_91] : memref<5xf32, #tpu.memory_space<smem>>
    %170 = vector.broadcast %169 : f32 to vector<1x128xf32>
    %171 = arith.addf %168, %170 : vector<1x128xf32>
    %cst_92 = arith.constant 0.000000e+00 : f32
    %172 = vector.broadcast %cst_92 : f32 to vector<1x128xf32>
    %173 = arith.maximumf %171, %172 : vector<1x128xf32>
    %c0_93 = arith.constant 0 : index
    %c0_94 = arith.constant 0 : index
    %174 = memref.load %arg4[%c0_93, %c0_94] : memref<3x5xf32, #tpu.memory_space<smem>>
    %175 = vector.broadcast %174 : f32 to vector<1x128xf32>
    %176 = arith.mulf %45, %175 : vector<1x128xf32>
    %c0_95 = arith.constant 0 : index
    %c1_96 = arith.constant 1 : index
    %177 = memref.load %arg4[%c0_95, %c1_96] : memref<3x5xf32, #tpu.memory_space<smem>>
    %178 = vector.broadcast %177 : f32 to vector<1x128xf32>
    %179 = arith.mulf %77, %178 : vector<1x128xf32>
    %180 = arith.addf %176, %179 : vector<1x128xf32>
    %c0_97 = arith.constant 0 : index
    %c2_98 = arith.constant 2 : index
    %181 = memref.load %arg4[%c0_97, %c2_98] : memref<3x5xf32, #tpu.memory_space<smem>>
    %182 = vector.broadcast %181 : f32 to vector<1x128xf32>
    %183 = arith.mulf %109, %182 : vector<1x128xf32>
    %184 = arith.addf %180, %183 : vector<1x128xf32>
    %c0_99 = arith.constant 0 : index
    %c3_100 = arith.constant 3 : index
    %185 = memref.load %arg4[%c0_99, %c3_100] : memref<3x5xf32, #tpu.memory_space<smem>>
    %186 = vector.broadcast %185 : f32 to vector<1x128xf32>
    %187 = arith.mulf %141, %186 : vector<1x128xf32>
    %188 = arith.addf %184, %187 : vector<1x128xf32>
    %c0_101 = arith.constant 0 : index
    %c4_102 = arith.constant 4 : index
    %189 = memref.load %arg4[%c0_101, %c4_102] : memref<3x5xf32, #tpu.memory_space<smem>>
    %190 = vector.broadcast %189 : f32 to vector<1x128xf32>
    %191 = arith.mulf %173, %190 : vector<1x128xf32>
    %192 = arith.addf %188, %191 : vector<1x128xf32>
    %c0_103 = arith.constant 0 : index
    %193 = memref.load %arg5[%c0_103] : memref<3xf32, #tpu.memory_space<smem>>
    %194 = vector.broadcast %193 : f32 to vector<1x128xf32>
    %195 = arith.addf %192, %194 : vector<1x128xf32>
    %cst_104 = arith.constant 0.000000e+00 : f32
    %196 = vector.broadcast %cst_104 : f32 to vector<1x128xf32>
    %197 = arith.maximumf %195, %196 : vector<1x128xf32>
    %c1_105 = arith.constant 1 : index
    %c0_106 = arith.constant 0 : index
    %198 = memref.load %arg4[%c1_105, %c0_106] : memref<3x5xf32, #tpu.memory_space<smem>>
    %199 = vector.broadcast %198 : f32 to vector<1x128xf32>
    %200 = arith.mulf %45, %199 : vector<1x128xf32>
    %c1_107 = arith.constant 1 : index
    %c1_108 = arith.constant 1 : index
    %201 = memref.load %arg4[%c1_107, %c1_108] : memref<3x5xf32, #tpu.memory_space<smem>>
    %202 = vector.broadcast %201 : f32 to vector<1x128xf32>
    %203 = arith.mulf %77, %202 : vector<1x128xf32>
    %204 = arith.addf %200, %203 : vector<1x128xf32>
    %c1_109 = arith.constant 1 : index
    %c2_110 = arith.constant 2 : index
    %205 = memref.load %arg4[%c1_109, %c2_110] : memref<3x5xf32, #tpu.memory_space<smem>>
    %206 = vector.broadcast %205 : f32 to vector<1x128xf32>
    %207 = arith.mulf %109, %206 : vector<1x128xf32>
    %208 = arith.addf %204, %207 : vector<1x128xf32>
    %c1_111 = arith.constant 1 : index
    %c3_112 = arith.constant 3 : index
    %209 = memref.load %arg4[%c1_111, %c3_112] : memref<3x5xf32, #tpu.memory_space<smem>>
    %210 = vector.broadcast %209 : f32 to vector<1x128xf32>
    %211 = arith.mulf %141, %210 : vector<1x128xf32>
    %212 = arith.addf %208, %211 : vector<1x128xf32>
    %c1_113 = arith.constant 1 : index
    %c4_114 = arith.constant 4 : index
    %213 = memref.load %arg4[%c1_113, %c4_114] : memref<3x5xf32, #tpu.memory_space<smem>>
    %214 = vector.broadcast %213 : f32 to vector<1x128xf32>
    %215 = arith.mulf %173, %214 : vector<1x128xf32>
    %216 = arith.addf %212, %215 : vector<1x128xf32>
    %c1_115 = arith.constant 1 : index
    %217 = memref.load %arg5[%c1_115] : memref<3xf32, #tpu.memory_space<smem>>
    %218 = vector.broadcast %217 : f32 to vector<1x128xf32>
    %219 = arith.addf %216, %218 : vector<1x128xf32>
    %cst_116 = arith.constant 0.000000e+00 : f32
    %220 = vector.broadcast %cst_116 : f32 to vector<1x128xf32>
    %221 = arith.maximumf %219, %220 : vector<1x128xf32>
    %c2_117 = arith.constant 2 : index
    %c0_118 = arith.constant 0 : index
    %222 = memref.load %arg4[%c2_117, %c0_118] : memref<3x5xf32, #tpu.memory_space<smem>>
    %223 = vector.broadcast %222 : f32 to vector<1x128xf32>
    %224 = arith.mulf %45, %223 : vector<1x128xf32>
    %c2_119 = arith.constant 2 : index
    %c1_120 = arith.constant 1 : index
    %225 = memref.load %arg4[%c2_119, %c1_120] : memref<3x5xf32, #tpu.memory_space<smem>>
    %226 = vector.broadcast %225 : f32 to vector<1x128xf32>
    %227 = arith.mulf %77, %226 : vector<1x128xf32>
    %228 = arith.addf %224, %227 : vector<1x128xf32>
    %c2_121 = arith.constant 2 : index
    %c2_122 = arith.constant 2 : index
    %229 = memref.load %arg4[%c2_121, %c2_122] : memref<3x5xf32, #tpu.memory_space<smem>>
    %230 = vector.broadcast %229 : f32 to vector<1x128xf32>
    %231 = arith.mulf %109, %230 : vector<1x128xf32>
    %232 = arith.addf %228, %231 : vector<1x128xf32>
    %c2_123 = arith.constant 2 : index
    %c3_124 = arith.constant 3 : index
    %233 = memref.load %arg4[%c2_123, %c3_124] : memref<3x5xf32, #tpu.memory_space<smem>>
    %234 = vector.broadcast %233 : f32 to vector<1x128xf32>
    %235 = arith.mulf %141, %234 : vector<1x128xf32>
    %236 = arith.addf %232, %235 : vector<1x128xf32>
    %c2_125 = arith.constant 2 : index
    %c4_126 = arith.constant 4 : index
    %237 = memref.load %arg4[%c2_125, %c4_126] : memref<3x5xf32, #tpu.memory_space<smem>>
    %238 = vector.broadcast %237 : f32 to vector<1x128xf32>
    %239 = arith.mulf %173, %238 : vector<1x128xf32>
    %240 = arith.addf %236, %239 : vector<1x128xf32>
    %c2_127 = arith.constant 2 : index
    %241 = memref.load %arg5[%c2_127] : memref<3xf32, #tpu.memory_space<smem>>
    %242 = vector.broadcast %241 : f32 to vector<1x128xf32>
    %243 = arith.addf %240, %242 : vector<1x128xf32>
    %cst_128 = arith.constant 0.000000e+00 : f32
    %244 = vector.broadcast %cst_128 : f32 to vector<1x128xf32>
    %245 = arith.maximumf %243, %244 : vector<1x128xf32>
    %c0_129 = arith.constant 0 : index
    %c0_130 = arith.constant 0 : index
    %246 = memref.load %arg6[%c0_129, %c0_130] : memref<2x3xf32, #tpu.memory_space<smem>>
    %247 = vector.broadcast %246 : f32 to vector<1x128xf32>
    %248 = arith.mulf %197, %247 : vector<1x128xf32>
    %c0_131 = arith.constant 0 : index
    %c1_132 = arith.constant 1 : index
    %249 = memref.load %arg6[%c0_131, %c1_132] : memref<2x3xf32, #tpu.memory_space<smem>>
    %250 = vector.broadcast %249 : f32 to vector<1x128xf32>
    %251 = arith.mulf %221, %250 : vector<1x128xf32>
    %252 = arith.addf %248, %251 : vector<1x128xf32>
    %c0_133 = arith.constant 0 : index
    %c2_134 = arith.constant 2 : index
    %253 = memref.load %arg6[%c0_133, %c2_134] : memref<2x3xf32, #tpu.memory_space<smem>>
    %254 = vector.broadcast %253 : f32 to vector<1x128xf32>
    %255 = arith.mulf %245, %254 : vector<1x128xf32>
    %256 = arith.addf %252, %255 : vector<1x128xf32>
    %c0_135 = arith.constant 0 : index
    %257 = memref.load %arg7[%c0_135] : memref<2xf32, #tpu.memory_space<smem>>
    %258 = vector.broadcast %257 : f32 to vector<1x128xf32>
    %259 = arith.addf %256, %258 : vector<1x128xf32>
    %cst_136 = arith.constant 0.000000e+00 : f32
    %260 = vector.broadcast %cst_136 : f32 to vector<1x128xf32>
    %261 = arith.maximumf %259, %260 : vector<1x128xf32>
    %c1_137 = arith.constant 1 : index
    %c0_138 = arith.constant 0 : index
    %262 = memref.load %arg6[%c1_137, %c0_138] : memref<2x3xf32, #tpu.memory_space<smem>>
    %263 = vector.broadcast %262 : f32 to vector<1x128xf32>
    %264 = arith.mulf %197, %263 : vector<1x128xf32>
    %c1_139 = arith.constant 1 : index
    %c1_140 = arith.constant 1 : index
    %265 = memref.load %arg6[%c1_139, %c1_140] : memref<2x3xf32, #tpu.memory_space<smem>>
    %266 = vector.broadcast %265 : f32 to vector<1x128xf32>
    %267 = arith.mulf %221, %266 : vector<1x128xf32>
    %268 = arith.addf %264, %267 : vector<1x128xf32>
    %c1_141 = arith.constant 1 : index
    %c2_142 = arith.constant 2 : index
    %269 = memref.load %arg6[%c1_141, %c2_142] : memref<2x3xf32, #tpu.memory_space<smem>>
    %270 = vector.broadcast %269 : f32 to vector<1x128xf32>
    %271 = arith.mulf %245, %270 : vector<1x128xf32>
    %272 = arith.addf %268, %271 : vector<1x128xf32>
    %c1_143 = arith.constant 1 : index
    %273 = memref.load %arg7[%c1_143] : memref<2xf32, #tpu.memory_space<smem>>
    %274 = vector.broadcast %273 : f32 to vector<1x128xf32>
    %275 = arith.addf %272, %274 : vector<1x128xf32>
    %cst_144 = arith.constant 0.000000e+00 : f32
    %276 = vector.broadcast %cst_144 : f32 to vector<1x128xf32>
    %277 = arith.maximumf %275, %276 : vector<1x128xf32>
    %c0_145 = arith.constant 0 : index
    %c0_146 = arith.constant 0 : index
    %278 = memref.load %arg8[%c0_145, %c0_146] : memref<1x2xf32, #tpu.memory_space<smem>>
    %279 = vector.broadcast %278 : f32 to vector<1x128xf32>
    %280 = arith.mulf %261, %279 : vector<1x128xf32>
    %c0_147 = arith.constant 0 : index
    %c1_148 = arith.constant 1 : index
    %281 = memref.load %arg8[%c0_147, %c1_148] : memref<1x2xf32, #tpu.memory_space<smem>>
    %282 = vector.broadcast %281 : f32 to vector<1x128xf32>
    %283 = arith.mulf %277, %282 : vector<1x128xf32>
    %284 = arith.addf %280, %283 : vector<1x128xf32>
    %c0_149 = arith.constant 0 : index
    %285 = memref.load %arg9[%c0_149] : memref<1xf32, #tpu.memory_space<smem>>
    %286 = vector.broadcast %285 : f32 to vector<1x128xf32>
    %287 = arith.addf %284, %286 : vector<1x128xf32>
    %cst_150 = arith.constant 5.000000e-01 : f32
    %288 = vector.broadcast %cst_150 : f32 to vector<1x128xf32>
    %289 = arith.mulf %288, %287 : vector<1x128xf32>
    %290 = math.tanh %289 : vector<1x128xf32>
    %cst_151 = arith.constant 5.000000e-01 : f32
    %291 = vector.broadcast %cst_151 : f32 to vector<1x128xf32>
    %292 = arith.mulf %291, %290 : vector<1x128xf32>
    %cst_152 = arith.constant 5.000000e-01 : f32
    %293 = vector.broadcast %cst_152 : f32 to vector<1x128xf32>
    %294 = arith.addf %292, %293 : vector<1x128xf32>
    %c0_153 = arith.constant 0 : index
    %c0_154 = arith.constant 0 : index
    %295 = vector.load %arg10[%c0_153, %c0_154] : memref<1x128xf32, #tpu.memory_space<vmem>>, vector<1x128xf32>
    tpu.vector_store %arg10[%c0_153, %c0_154], %294 {strides = array<i32>} : memref<1x128xf32, #tpu.memory_space<vmem>>, vector<1x128xf32>,
    return
  }
  func.func @transform_0(%arg0: i32) -> (i32, i32, i32) {
    %c0_i32 = arith.constant 0 : i32
    %c0_i32_0 = arith.constant 0 : i32
    %c0_i32_1 = arith.constant 0 : i32
    return %c0_i32, %arg0, %c0_i32_0 : i32, i32, i32
  }
  func.func @transform_1(%arg0: i32) -> (i32, i32) {
    %c0_i32 = arith.constant 0 : i32
    %c0_i32_0 = arith.constant 0 : i32
    %c0_i32_1 = arith.constant 0 : i32
    return %c0_i32, %c0_i32_0 : i32, i32
  }
  func.func @transform_2(%arg0: i32) -> i32 {
    %c0_i32 = arith.constant 0 : i32
    %c0_i32_0 = arith.constant 0 : i32
    return %c0_i32 : i32
  }
  func.func @transform_3(%arg0: i32) -> (i32, i32) {
    %c0_i32 = arith.constant 0 : i32
    %c0_i32_0 = arith.constant 0 : i32
    %c0_i32_1 = arith.constant 0 : i32
    return %c0_i32, %c0_i32_0 : i32, i32
  }
  func.func @transform_4(%arg0: i32) -> i32 {
    %c0_i32 = arith.constant 0 : i32
    %c0_i32_0 = arith.constant 0 : i32
    return %c0_i32 : i32
  }
  func.func @transform_5(%arg0: i32) -> (i32, i32) {
    %c0_i32 = arith.constant 0 : i32
    %c0_i32_0 = arith.constant 0 : i32
    %c0_i32_1 = arith.constant 0 : i32
    return %c0_i32, %c0_i32_0 : i32, i32
  }
  func.func @transform_6(%arg0: i32) -> i32 {
    %c0_i32 = arith.constant 0 : i32
    %c0_i32_0 = arith.constant 0 : i32
    return %c0_i32 : i32
  }
  func.func @transform_7(%arg0: i32) -> (i32, i32) {
    %c0_i32 = arith.constant 0 : i32
    %c0_i32_0 = arith.constant 0 : i32
    %c0_i32_1 = arith.constant 0 : i32
    return %c0_i32, %c0_i32_0 : i32, i32
  }
  func.func @transform_8(%arg0: i32) -> i32 {
    %c0_i32 = arith.constant 0 : i32
    %c0_i32_0 = arith.constant 0 : i32
    return %c0_i32 : i32
  }
  func.func @transform_9(%arg0: i32) -> (i32, i32) {
    %c0_i32 = arith.constant 0 : i32
    %c0_i32_0 = arith.constant 0 : i32
    return %arg0, %c0_i32 : i32, i32
  }
}

</mosaic_0001>

<llo_original>
// kernel: mlp_forward_packed.1
$region0: #{mlp_forward_packed.1}
  #allocation0 [shape = 'u32[]', space=smem, size = 0x4, offset = 0x4, fixed_abs, tag = 'smem constant byte address 0x4 - core index']
  #allocation1 [shape = 'u32[144,128]{1,0:T(1,128)}', space=vmem, size = 0x12000, scoped, tag = 'internal scratch']
  #allocation2 [shape = 'f32[1]{0:T(128)S(6)}', space=smem, size = 0x200, scoped, tag = 'scoped memory for mlp_forward_packed.1']
  %s0 = inlined_call_operand.vmem [shape: f32[7,1,128], index: 0, kind: input, shape index: {}]
  %s1 = inlined_call_operand.vmem [shape: f32[5,7], index: 1, kind: input, shape index: {}]
  %s2 = inlined_call_operand.vmem [shape: f32[5], index: 2, kind: input, shape index: {}]
  %s3 = inlined_call_operand.vmem [shape: f32[3,5], index: 3, kind: input, shape index: {}]
  %s4 = inlined_call_operand.vmem [shape: f32[3], index: 4, kind: input, shape index: {}]
  %s5 = inlined_call_operand.vmem [shape: f32[2,3], index: 5, kind: input, shape index: {}]
  %s6 = inlined_call_operand.vmem [shape: f32[2], index: 6, kind: input, shape index: {}]
  %s7 = inlined_call_operand.vmem [shape: f32[1,2], index: 7, kind: input, shape index: {}]
  %s8 = inlined_call_operand.<no memory space> [shape: f32[1], index: 8, kind: input, shape index: {}]
  %s9 = inlined_call_operand.vmem [shape: f32[1,128], index: 9, kind: output, shape index: {}]
  %s10 = sld [smem:[#allocation0]]
  $region74: #{mlp_forward_packed.1} parent=0
    _
  %s12 = ssub.s32 1, %s10
  %s13 = scalar_select 0, %s12, %s10
  %14 = sst [smem:[#allocation2]] %s8
  $region1: #{mlp_forward_packed.1} parent=0
    #allocation3 [shape = 'u8[4096]{0}', space=smem, size = 0x1000, scoped, tag = 'input window, operand 1, single buffered']
    #allocation4 [shape = 's32[1]{0}', space=sflag, size = 0x4, scoped, tag = 'scoped memory for mlp_forward_packed.1']
    #allocation5 [shape = 'u8[512]{0}', space=smem, size = 0x200, scoped, tag = 'input window, operand 2, single buffered']
    #allocation6 [shape = 's32[1]{0}', space=sflag, size = 0x4, scoped, tag = 'scoped memory for mlp_forward_packed.1']
    #allocation7 [shape = 'u8[2048]{0}', space=smem, size = 0x800, scoped, tag = 'input window, operand 3, single buffered']
    #allocation8 [shape = 'u8[512]{0}', space=smem, size = 0x200, scoped, tag = 'input window, operand 4, single buffered']
    #allocation9 [shape = 's32[1]{0}', space=sflag, size = 0x4, scoped, tag = 'scoped memory for mlp_forward_packed.1']
    #allocation10 [shape = 'u8[1024]{0}', space=smem, size = 0x400, scoped, tag = 'input window, operand 5, single buffered']
    #allocation11 [shape = 'u8[512]{0}', space=smem, size = 0x200, scoped, tag = 'input window, operand 6, single buffered']
    #allocation12 [shape = 's32[1]{0}', space=sflag, size = 0x4, scoped, tag = 'scoped memory for mlp_forward_packed.1']
    #allocation13 [shape = 'u8[512]{0}', space=smem, size = 0x200, scoped, tag = 'input window, operand 7, single buffered']
    %15 = vsyncpa [#allocation4], 0
    %16 = vsyncpa [#allocation6], 0
    %17 = vsyncpa [#allocation9], 0
    %18 = vsyncpa [#allocation12], 0
    // Predicated region
    $region2: #{mlp_forward_packed.1} parent=1 // pred_check
      _
    $region3: #{mlp_forward_packed.1} parent=1 // pred_check_branch
      %20 = sbr.rel (0) target = $region5
    $region4: #{mlp_forward_packed.1} parent=1 // pred_region
      _
    $region5: #{mlp_forward_packed.1} parent=1 // pred_fallthru
      _
    // Predicated region
    $region6: #{mlp_forward_packed.1} parent=1 // pred_check
      _
    $region7: #{mlp_forward_packed.1} parent=1 // pred_check_branch
      %22 = sbr.rel (0) target = $region9
    $region8: #{mlp_forward_packed.1} parent=1 // pred_region
      %s24 = ssub.s32 128, 128
      %25 = vsyncadd [#allocation4], %s24
      %s27 = sshll.u32 %s1, 4
      %s28 = int_to_ptr.vmem [resolvable:$true] %s27
      %30 = dma.vmem_to_smem %s28, 128, [#allocation3], [#allocation4]
    $region9: #{mlp_forward_packed.1} parent=1 // pred_fallthru
      _
    // Predicated region
    $region10: #{mlp_forward_packed.1} parent=1 // pred_check
      _
    $region11: #{mlp_forward_packed.1} parent=1 // pred_check_branch
      %32 = sbr.rel (0) target = $region13
    $region12: #{mlp_forward_packed.1} parent=1 // pred_region
      %s34 = ssub.s32 16, 16
      %35 = vsyncadd [#allocation6], %s34
      %s37 = sshll.u32 %s2, 4
      %s38 = int_to_ptr.vmem [resolvable:$true] %s37
      %40 = dma.vmem_to_smem %s38, 16, [#allocation5], [#allocation6]
    $region13: #{mlp_forward_packed.1} parent=1 // pred_fallthru
      _
    // Predicated region
    $region14: #{mlp_forward_packed.1} parent=1 // pred_check
      _
    $region15: #{mlp_forward_packed.1} parent=1 // pred_check_branch
      %42 = sbr.rel (0) target = $region17
    $region16: #{mlp_forward_packed.1} parent=1 // pred_region
      %s44 = ssub.s32 64, 64
      %45 = vsyncadd [#allocation6], %s44
      %s47 = sshll.u32 %s3, 4
      %s48 = int_to_ptr.vmem [resolvable:$true] %s47
      %50 = dma.vmem_to_smem %s48, 64, [#allocation7], [#allocation6]
    $region17: #{mlp_forward_packed.1} parent=1 // pred_fallthru
      _
    // Predicated region
    $region18: #{mlp_forward_packed.1} parent=1 // pred_check
      _
    $region19: #{mlp_forward_packed.1} parent=1 // pred_check_branch
      %52 = sbr.rel (0) target = $region21
    $region20: #{mlp_forward_packed.1} parent=1 // pred_region
      %s54 = ssub.s32 16, 16
      %55 = vsyncadd [#allocation9], %s54
      %s57 = sshll.u32 %s4, 4
      %s58 = int_to_ptr.vmem [resolvable:$true] %s57
      %60 = dma.vmem_to_smem %s58, 16, [#allocation8], [#allocation9]
    $region21: #{mlp_forward_packed.1} parent=1 // pred_fallthru
      _
    // Predicated region
    $region22: #{mlp_forward_packed.1} parent=1 // pred_check
      _
    $region23: #{mlp_forward_packed.1} parent=1 // pred_check_branch
      %62 = sbr.rel (0) target = $region25
    $region24: #{mlp_forward_packed.1} parent=1 // pred_region
      %s64 = ssub.s32 32, 32
      %65 = vsyncadd [#allocation9], %s64
      %s67 = sshll.u32 %s5, 4
      %s68 = int_to_ptr.vmem [resolvable:$true] %s67
      %70 = dma.vmem_to_smem %s68, 32, [#allocation10], [#allocation9]
    $region25: #{mlp_forward_packed.1} parent=1 // pred_fallthru
      _
    // Predicated region
    $region26: #{mlp_forward_packed.1} parent=1 // pred_check
      _
    $region27: #{mlp_forward_packed.1} parent=1 // pred_check_branch
      %72 = sbr.rel (0) target = $region29
    $region28: #{mlp_forward_packed.1} parent=1 // pred_region
      %s74 = ssub.s32 16, 16
      %75 = vsyncadd [#allocation12], %s74
      %s77 = sshll.u32 %s6, 4
      %s78 = int_to_ptr.vmem [resolvable:$true] %s77
      %80 = dma.vmem_to_smem %s78, 16, [#allocation11], [#allocation12]
    $region29: #{mlp_forward_packed.1} parent=1 // pred_fallthru
      _
    // Predicated region
    $region30: #{mlp_forward_packed.1} parent=1 // pred_check
      _
    $region31: #{mlp_forward_packed.1} parent=1 // pred_check_branch
      %82 = sbr.rel (0) target = $region33
    $region32: #{mlp_forward_packed.1} parent=1 // pred_region
      %s84 = ssub.s32 16, 16
      %85 = vsyncadd [#allocation12], %s84
      %s87 = sshll.u32 %s7, 4
      %s88 = int_to_ptr.vmem [resolvable:$true] %s87
      %90 = dma.vmem_to_smem %s88, 16, [#allocation13], [#allocation12]
    $region33: #{mlp_forward_packed.1} parent=1 // pred_fallthru
      _
    // Predicated region
    $region34: #{mlp_forward_packed.1} parent=1 // pred_check
      _
    $region35: #{mlp_forward_packed.1} parent=1 // pred_check_branch
      %92 = sbr.rel (0) target = $region37
    $region36: #{mlp_forward_packed.1} parent=1 // pred_region
      _
    $region37: #{mlp_forward_packed.1} parent=1 // pred_fallthru
      _
    // Predicated region
    $region38: #{mlp_forward_packed.1} parent=1 // pred_check
      _
    $region39: #{mlp_forward_packed.1} parent=1 // pred_check_branch
      %94 = sbr.rel (0) target = $region41
    $region40: #{mlp_forward_packed.1} parent=1 // pred_region
      %95 = dma.done [#allocation4], 128
    $region41: #{mlp_forward_packed.1} parent=1 // pred_fallthru
      _
    // Predicated region
    $region42: #{mlp_forward_packed.1} parent=1 // pred_check
      _
    $region43: #{mlp_forward_packed.1} parent=1 // pred_check_branch
      %97 = sbr.rel (0) target = $region45
    $region44: #{mlp_forward_packed.1} parent=1 // pred_region
      %98 = dma.done [#allocation6], 16
    $region45: #{mlp_forward_packed.1} parent=1 // pred_fallthru
      _
    // Predicated region
    $region46: #{mlp_forward_packed.1} parent=1 // pred_check
      _
    $region47: #{mlp_forward_packed.1} parent=1 // pred_check_branch
      %100 = sbr.rel (0) target = $region49
    $region48: #{mlp_forward_packed.1} parent=1 // pred_region
      %101 = dma.done [#allocation6], 64
    $region49: #{mlp_forward_packed.1} parent=1 // pred_fallthru
      _
    // Predicated region
    $region50: #{mlp_forward_packed.1} parent=1 // pred_check
      _
    $region51: #{mlp_forward_packed.1} parent=1 // pred_check_branch
      %103 = sbr.rel (0) target = $region53
    $region52: #{mlp_forward_packed.1} parent=1 // pred_region
      %104 = dma.done [#allocation9], 16
    $region53: #{mlp_forward_packed.1} parent=1 // pred_fallthru
      _
    // Predicated region
    $region54: #{mlp_forward_packed.1} parent=1 // pred_check
      _
    $region55: #{mlp_forward_packed.1} parent=1 // pred_check_branch
      %106 = sbr.rel (0) target = $region57
    $region56: #{mlp_forward_packed.1} parent=1 // pred_region
      %107 = dma.done [#allocation9], 32
    $region57: #{mlp_forward_packed.1} parent=1 // pred_fallthru
      _
    // Predicated region
    $region58: #{mlp_forward_packed.1} parent=1 // pred_check
      _
    $region59: #{mlp_forward_packed.1} parent=1 // pred_check_branch
      %109 = sbr.rel (0) target = $region61
    $region60: #{mlp_forward_packed.1} parent=1 // pred_region
      %110 = dma.done [#allocation12], 16
    $region61: #{mlp_forward_packed.1} parent=1 // pred_fallthru
      _
    // Predicated region
    $region62: #{mlp_forward_packed.1} parent=1 // pred_check
      _
    $region63: #{mlp_forward_packed.1} parent=1 // pred_check_branch
      %112 = sbr.rel (0) target = $region65
    $region64: #{mlp_forward_packed.1} parent=1 // pred_region
      %113 = dma.done [#allocation12], 16
    $region65: #{mlp_forward_packed.1} parent=1 // pred_fallthru
      _
    %114 = sfence
    %v115 = vld [vmem:[%s0] sm:$0x1]
    %s116 = scalar_lea.vmem %s0, 1
    %v117 = vld [vmem:[%s116] sm:$0x1]
    %s118 = scalar_lea.vmem %s0, 2
    %v119 = vld [vmem:[%s118] sm:$0x1]
    %s120 = scalar_lea.vmem %s0, 3
    %v121 = vld [vmem:[%s120] sm:$0x1]
    %s122 = scalar_lea.vmem %s0, 4
    %v123 = vld [vmem:[%s122] sm:$0x1]
    %s124 = scalar_lea.vmem %s0, 5
    %v125 = vld [vmem:[%s124] sm:$0x1]
    %s126 = scalar_lea.vmem %s0, 6
    %v127 = vld [vmem:[%s126] sm:$0x1]
    %s128 = sld [smem:[#allocation3]]
    %v129 = vstv %s128
    %v130 = vmul.f32 %v115, %v129
    %s131 = sld [smem:[#allocation3 + $0x1]]
    %v132 = vstv %s131
    %v133 = vmul.f32 %v117, %v132
    %v134 = vadd.f32 %v130, %v133
    %s135 = sld [smem:[#allocation3 + $0x2]]
    %v136 = vstv %s135
    %v137 = vmul.f32 %v119, %v136
    %v138 = vadd.f32 %v134, %v137
    %s139 = sld [smem:[#allocation3 + $0x3]]
    %v140 = vstv %s139
    %v141 = vmul.f32 %v121, %v140
    %v142 = vadd.f32 %v138, %v141
    %s143 = sld [smem:[#allocation3 + $0x4]]
    %v144 = vstv %s143
    %v145 = vmul.f32 %v123, %v144
    %v146 = vadd.f32 %v142, %v145
    %s147 = sld [smem:[#allocation3 + $0x5]]
    %v148 = vstv %s147
    %v149 = vmul.f32 %v125, %v148
    %v150 = vadd.f32 %v146, %v149
    %s151 = sld [smem:[#allocation3 + $0x6]]
    %v152 = vstv %s151
    %v153 = vmul.f32 %v127, %v152
    %v154 = vadd.f32 %v150, %v153
    %s155 = sld [smem:[#allocation5]]
    %v156 = vstv %s155
    %v157 = vadd.f32 %v154, %v156
    %v158 = vmax.f32 %v157, 0.0
    %s159 = sld [smem:[#allocation3 + $0x80]]
    %v160 = vstv %s159
    %v161 = vmul.f32 %v115, %v160
    %s162 = sld [smem:[#allocation3 + $0x81]]
    %v163 = vstv %s162
    %v164 = vmul.f32 %v117, %v163
    %v165 = vadd.f32 %v161, %v164
    %s166 = sld [smem:[#allocation3 + $0x82]]
    %v167 = vstv %s166
    %v168 = vmul.f32 %v119, %v167
    %v169 = vadd.f32 %v165, %v168
    %s170 = sld [smem:[#allocation3 + $0x83]]
    %v171 = vstv %s170
    %v172 = vmul.f32 %v121, %v171
    %v173 = vadd.f32 %v169, %v172
    %s174 = sld [smem:[#allocation3 + $0x84]]
    %v175 = vstv %s174
    %v176 = vmul.f32 %v123, %v175
    %v177 = vadd.f32 %v173, %v176
    %s178 = sld [smem:[#allocation3 + $0x85]]
    %v179 = vstv %s178
    %v180 = vmul.f32 %v125, %v179
    %v181 = vadd.f32 %v177, %v180
    %s182 = sld [smem:[#allocation3 + $0x86]]
    %v183 = vstv %s182
    %v184 = vmul.f32 %v127, %v183
    %v185 = vadd.f32 %v181, %v184
    %s186 = sld [smem:[#allocation5 + $0x1]]
    %v187 = vstv %s186
    %v188 = vadd.f32 %v185, %v187
    %v189 = vmax.f32 %v188, 0.0
    %s190 = sld [smem:[#allocation3 + $0x100]]
    %v191 = vstv %s190
    %v192 = vmul.f32 %v115, %v191
    %s193 = sld [smem:[#allocation3 + $0x101]]
    %v194 = vstv %s193
    %v195 = vmul.f32 %v117, %v194
    %v196 = vadd.f32 %v192, %v195
    %s197 = sld [smem:[#allocation3 + $0x102]]
    %v198 = vstv %s197
    %v199 = vmul.f32 %v119, %v198
    %v200 = vadd.f32 %v196, %v199
    %s201 = sld [smem:[#allocation3 + $0x103]]
    %v202 = vstv %s201
    %v203 = vmul.f32 %v121, %v202
    %v204 = vadd.f32 %v200, %v203
    %s205 = sld [smem:[#allocation3 + $0x104]]
    %v206 = vstv %s205
    %v207 = vmul.f32 %v123, %v206
    %v208 = vadd.f32 %v204, %v207
    %s209 = sld [smem:[#allocation3 + $0x105]]
    %v210 = vstv %s209
    %v211 = vmul.f32 %v125, %v210
    %v212 = vadd.f32 %v208, %v211
    %s213 = sld [smem:[#allocation3 + $0x106]]
    %v214 = vstv %s213
    %v215 = vmul.f32 %v127, %v214
    %v216 = vadd.f32 %v212, %v215
    %s217 = sld [smem:[#allocation5 + $0x2]]
    %v218 = vstv %s217
    %v219 = vadd.f32 %v216, %v218
    %v220 = vmax.f32 %v219, 0.0
    %s221 = sld [smem:[#allocation3 + $0x180]]
    %v222 = vstv %s221
    %v223 = vmul.f32 %v115, %v222
    %s224 = sld [smem:[#allocation3 + $0x181]]
    %v225 = vstv %s224
    %v226 = vmul.f32 %v117, %v225
    %v227 = vadd.f32 %v223, %v226
    %s228 = sld [smem:[#allocation3 + $0x182]]
    %v229 = vstv %s228
    %v230 = vmul.f32 %v119, %v229
    %v231 = vadd.f32 %v227, %v230
    %s232 = sld [smem:[#allocation3 + $0x183]]
    %v233 = vstv %s232
    %v234 = vmul.f32 %v121, %v233
    %v235 = vadd.f32 %v231, %v234
    %s236 = sld [smem:[#allocation3 + $0x184]]
    %v237 = vstv %s236
    %v238 = vmul.f32 %v123, %v237
    %v239 = vadd.f32 %v235, %v238
    %s240 = sld [smem:[#allocation3 + $0x185]]
    %v241 = vstv %s240
    %v242 = vmul.f32 %v125, %v241
    %v243 = vadd.f32 %v239, %v242
    %s244 = sld [smem:[#allocation3 + $0x186]]
    %v245 = vstv %s244
    %v246 = vmul.f32 %v127, %v245
    %v247 = vadd.f32 %v243, %v246
    %s248 = sld [smem:[#allocation5 + $0x3]]
    %v249 = vstv %s248
    %v250 = vadd.f32 %v247, %v249
    %v251 = vmax.f32 %v250, 0.0
    %s252 = sld [smem:[#allocation3 + $0x200]]
    %v253 = vstv %s252
    %v254 = vmul.f32 %v115, %v253
    %s255 = sld [smem:[#allocation3 + $0x201]]
    %v256 = vstv %s255
    %v257 = vmul.f32 %v117, %v256
    %v258 = vadd.f32 %v254, %v257
    %s259 = sld [smem:[#allocation3 + $0x202]]
    %v260 = vstv %s259
    %v261 = vmul.f32 %v119, %v260
    %v262 = vadd.f32 %v258, %v261
    %s263 = sld [smem:[#allocation3 + $0x203]]
    %v264 = vstv %s263
    %v265 = vmul.f32 %v121, %v264
    %v266 = vadd.f32 %v262, %v265
    %s267 = sld [smem:[#allocation3 + $0x204]]
    %v268 = vstv %s267
    %v269 = vmul.f32 %v123, %v268
    %v270 = vadd.f32 %v266, %v269
    %s271 = sld [smem:[#allocation3 + $0x205]]
    %v272 = vstv %s271
    %v273 = vmul.f32 %v125, %v272
    %v274 = vadd.f32 %v270, %v273
    %s275 = sld [smem:[#allocation3 + $0x206]]
    %v276 = vstv %s275
    %v277 = vmul.f32 %v127, %v276
    %v278 = vadd.f32 %v274, %v277
    %s279 = sld [smem:[#allocation5 + $0x4]]
    %v280 = vstv %s279
    %v281 = vadd.f32 %v278, %v280
    %v282 = vmax.f32 %v281, 0.0
    %s283 = sld [smem:[#allocation7]]
    %v284 = vstv %s283
    %v285 = vmul.f32 %v158, %v284
    %s286 = sld [smem:[#allocation7 + $0x1]]
    %v287 = vstv %s286
    %v288 = vmul.f32 %v189, %v287
    %v289 = vadd.f32 %v285, %v288
    %s290 = sld [smem:[#allocation7 + $0x2]]
    %v291 = vstv %s290
    %v292 = vmul.f32 %v220, %v291
    %v293 = vadd.f32 %v289, %v292
    %s294 = sld [smem:[#allocation7 + $0x3]]
    %v295 = vstv %s294
    %v296 = vmul.f32 %v251, %v295
    %v297 = vadd.f32 %v293, %v296
    %s298 = sld [smem:[#allocation7 + $0x4]]
    %v299 = vstv %s298
    %v300 = vmul.f32 %v282, %v299
    %v301 = vadd.f32 %v297, %v300
    %s302 = sld [smem:[#allocation8]]
    %v303 = vstv %s302
    %v304 = vadd.f32 %v301, %v303
    %v305 = vmax.f32 %v304, 0.0
    %s306 = sld [smem:[#allocation7 + $0x80]]
    %v307 = vstv %s306
    %v308 = vmul.f32 %v158, %v307
    %s309 = sld [smem:[#allocation7 + $0x81]]
    %v310 = vstv %s309
    %v311 = vmul.f32 %v189, %v310
    %v312 = vadd.f32 %v308, %v311
    %s313 = sld [smem:[#allocation7 + $0x82]]
    %v314 = vstv %s313
    %v315 = vmul.f32 %v220, %v314
    %v316 = vadd.f32 %v312, %v315
    %s317 = sld [smem:[#allocation7 + $0x83]]
    %v318 = vstv %s317
    %v319 = vmul.f32 %v251, %v318
    %v320 = vadd.f32 %v316, %v319
    %s321 = sld [smem:[#allocation7 + $0x84]]
    %v322 = vstv %s321
    %v323 = vmul.f32 %v282, %v322
    %v324 = vadd.f32 %v320, %v323
    %s325 = sld [smem:[#allocation8 + $0x1]]
    %v326 = vstv %s325
    %v327 = vadd.f32 %v324, %v326
    %v328 = vmax.f32 %v327, 0.0
    %s329 = sld [smem:[#allocation7 + $0x100]]
    %v330 = vstv %s329
    %v331 = vmul.f32 %v158, %v330
    %s332 = sld [smem:[#allocation7 + $0x101]]
    %v333 = vstv %s332
    %v334 = vmul.f32 %v189, %v333
    %v335 = vadd.f32 %v331, %v334
    %s336 = sld [smem:[#allocation7 + $0x102]]
    %v337 = vstv %s336
    %v338 = vmul.f32 %v220, %v337
    %v339 = vadd.f32 %v335, %v338
    %s340 = sld [smem:[#allocation7 + $0x103]]
    %v341 = vstv %s340
    %v342 = vmul.f32 %v251, %v341
    %v343 = vadd.f32 %v339, %v342
    %s344 = sld [smem:[#allocation7 + $0x104]]
    %v345 = vstv %s344
    %v346 = vmul.f32 %v282, %v345
    %v347 = vadd.f32 %v343, %v346
    %s348 = sld [smem:[#allocation8 + $0x2]]
    %v349 = vstv %s348
    %v350 = vadd.f32 %v347, %v349
    %v351 = vmax.f32 %v350, 0.0
    %s352 = sld [smem:[#allocation10]]
    %v353 = vstv %s352
    %v354 = vmul.f32 %v305, %v353
    %s355 = sld [smem:[#allocation10 + $0x1]]
    %v356 = vstv %s355
    %v357 = vmul.f32 %v328, %v356
    %v358 = vadd.f32 %v354, %v357
    %s359 = sld [smem:[#allocation10 + $0x2]]
    %v360 = vstv %s359
    %v361 = vmul.f32 %v351, %v360
    %v362 = vadd.f32 %v358, %v361
    %s363 = sld [smem:[#allocation11]]
    %v364 = vstv %s363
    %v365 = vadd.f32 %v362, %v364
    %v366 = vmax.f32 %v365, 0.0
    %s367 = sld [smem:[#allocation10 + $0x80]]
    %v368 = vstv %s367
    %v369 = vmul.f32 %v305, %v368
    %s370 = sld [smem:[#allocation10 + $0x81]]
    %v371 = vstv %s370
    %v372 = vmul.f32 %v328, %v371
    %v373 = vadd.f32 %v369, %v372
    %s374 = sld [smem:[#allocation10 + $0x82]]
    %v375 = vstv %s374
    %v376 = vmul.f32 %v351, %v375
    %v377 = vadd.f32 %v373, %v376
    %s378 = sld [smem:[#allocation11 + $0x1]]
    %v379 = vstv %s378
    %v380 = vadd.f32 %v377, %v379
    %v381 = vmax.f32 %v380, 0.0
    %s382 = sld [smem:[#allocation13]]
    %v383 = vstv %s382
    %v384 = vmul.f32 %v366, %v383
    %s385 = sld [smem:[#allocation13 + $0x1]]
    %v386 = vstv %s385
    %v387 = vmul.f32 %v381, %v386
    %v388 = vadd.f32 %v384, %v387
    %s389 = sld [smem:[#allocation2]]
    %v390 = vstv %s389
    %v391 = vadd.f32 %v388, %v390
    %v392 = vmul.f32 %v391, 0.5
    %v393 = vtanh.pop %v392
    %v394 = vmul.f32 %v393, 0.5
    %v395 = vadd.f32 %v394, 0.5
    %396 = vst [vmem:[%s9] sm:$0x1] %v395
    // Predicated region
    $region66: #{mlp_forward_packed.1} parent=1 // pred_check
      _
    $region67: #{mlp_forward_packed.1} parent=1 // pred_check_branch
      %398 = sbr.rel (0) target = $region69
    $region68: #{mlp_forward_packed.1} parent=1 // pred_region
      _
    $region69: #{mlp_forward_packed.1} parent=1 // pred_fallthru
      _
    // Predicated region
    $region70: #{mlp_forward_packed.1} parent=1 // pred_check
      _
    $region71: #{mlp_forward_packed.1} parent=1 // pred_check_branch
      %400 = sbr.rel (0) target = $region73
    $region72: #{mlp_forward_packed.1} parent=1 // pred_region
      _
    $region73: #{mlp_forward_packed.1} parent=1 // pred_fallthru
      _
    %401 = vsyncpa [#allocation4], 1
    %402 = vsyncpa [#allocation6], 1
    %403 = vsyncpa [#allocation9], 1
    %404 = vsyncpa [#allocation12], 1

</llo_original>
